<compile_context>
chip_gen: v7x
topology: tpu7x:2x2x1
jax: 0.10.0
libtpu: 0.0.40
codegen_flags: <defaults>
</compile_context>

<pallas_src>
import functools

import jax
import jax.numpy as jnp
from jax.experimental import pallas as pl
from jax.experimental.pallas import tpu as pltpu


def _round_up(x: int, m: int) -> int:
    return ((x + m - 1) // m) * m


def _vmem_budget_bytes() -> int:
    """Generation-aware VMEM budget (leave headroom below physical capacity)."""
    cap = 64 * 1024 * 1024  # conservative default (v7x per-TC VMEM)
    try:
        info = pltpu.get_tpu_info()
        cap = int(getattr(info, "vmem_capacity_bytes", cap))
    except Exception:
        pass
    return min(int(cap * 0.65), 100 * 1024 * 1024)


def _adaptive_tile(dim: int, align: int, max_tile: int, max_waste: float = 0.15) -> int:
    """Pick a tile size (multiple of `align`, <= max_tile) with small padding waste."""
    dim_al = _round_up(max(dim, 1), align)
    if dim_al <= max_tile:
        return dim_al  # single tile covering the whole (aligned) dim
    best_t, best_waste = align, 1.0
    t = max_tile
    while t >= align:
        p = _round_up(dim_al, t)
        waste = (p - dim_al) / p
        if waste <= max_waste:
            return t
        if waste < best_waste:
            best_t, best_waste = t, waste
        t //= 2
    return best_t


def _fit_tiles_to_budget(tm, tn, tk, in_bytes, out_bytes, budget, m_align):
    """Shrink tiles (tk first, then tn, then tm) until the VMEM estimate fits."""

    def usage(tm_, tn_, tk_):
        return (2 * tm_ * tk_ * in_bytes      # x, double-buffered
                + 2 * tk_ * tn_ * in_bytes    # weight, double-buffered
                + 2 * tn_ * in_bytes          # bias
                + 2 * tm_ * tn_ * out_bytes   # output, double-buffered
                + tm_ * tn_ * 4)              # f32 accumulator

    while usage(tm, tn, tk) > budget and tk > 128:
        tk //= 2
    while usage(tm, tn, tk) > budget and tn > 128:
        tn //= 2
    while usage(tm, tn, tk) > budget and tm > m_align:
        new_tm = max(((tm // 2) // m_align) * m_align, m_align)
        if new_tm == tm:
            break
        tm = new_tm
    return tm, tn, tk


def _fc_tiled_kernel(x_ref, w_ref, b_ref, o_ref, acc_ref, *, apply_relu: bool):
    # x_ref: (tm, tk), w_ref: (tk, tn), b_ref: (1, tn), o_ref: (tm, tn),
    # acc_ref: (tm, tn) f32 scratch, resident across the K grid axis.
    k = pl.program_id(2)

    @pl.when(k == 0)
    def _():
        # Fold the bias into the accumulator init (saves an epilogue add).
        acc_ref[...] = jnp.broadcast_to(
            b_ref[...].astype(jnp.float32), acc_ref.shape)

    acc_ref[...] += jnp.dot(
        x_ref[...], w_ref[...], preferred_element_type=jnp.float32)

    @pl.when(k == pl.num_programs(2) - 1)
    def _():
        acc = acc_ref[...]
        if apply_relu:
            acc = jnp.maximum(acc, 0.0)
        o_ref[...] = acc.astype(o_ref.dtype)


def _fc_resident_kernel(x_ref, w_ref, b_ref, o_ref, *, apply_relu: bool):
    # Weight-resident fast path: whole (Kp, Np) weight lives in VMEM, DMA'd once.
    acc = jnp.dot(x_ref[...], w_ref[...], preferred_element_type=jnp.float32)
    acc = acc + b_ref[...].astype(jnp.float32)
    if apply_relu:
        acc = jnp.maximum(acc, 0.0)
    o_ref[...] = acc.astype(o_ref.dtype)


def fc_forward(x, weight_t, bias, relu=True, *, use_bf16=False,
               allow_weight_resident=True, vmem_limit_bytes=None,
               max_tm=1024, max_tn=512, max_tk=512,
               weight_resident_max_bytes=8 * 1024 * 1024):
    """Pallas equivalent of FC.forward.

    x:        (B, in_features)
    weight_t: (in_features, out_features)   -- PyTorch weight.T
    bias:     (out_features,)
    """
    M, K = x.shape
    K2, N = weight_t.shape
    assert K == K2, (K, K2)
    assert bias.shape == (N,), bias.shape

    out_dtype = x.dtype
    if use_bf16:
        # MXU-native inputs; f32 accumulator + f32 bias add keep this safe.
        x = x.astype(jnp.bfloat16)
        weight_t = weight_t.astype(jnp.bfloat16)

    in_bytes = jnp.dtype(x.dtype).itemsize
    out_bytes = jnp.dtype(out_dtype).itemsize
    bias_bytes = jnp.dtype(bias.dtype).itemsize
    m_align = 16 if in_bytes == 2 else 8      # bf16 packs 2 rows per sublane

    budget = int(vmem_limit_bytes) if vmem_limit_bytes is not None else _vmem_budget_bytes()

    Kp_full = _round_up(K, 128)
    Np_full = _round_up(N, 128)
    w_full_bytes = Kp_full * Np_full * in_bytes

    # ---------------- Weight-resident fast path ----------------
    if allow_weight_resident and w_full_bytes <= weight_resident_max_bytes:
        tm = _adaptive_tile(M, m_align, min(max_tm, 512))
        usage = (2 * w_full_bytes
                 + 2 * tm * Kp_full * in_bytes
                 + 2 * tm * Np_full * out_bytes
                 + 2 * Np_full * bias_bytes)
        if usage <= budget:
            Mp, Kp, Np = _round_up(M, tm), Kp_full, Np_full
            if (Mp, Kp) != (M, K):
                x = jnp.pad(x, ((0, Mp - M), (0, Kp - K)))
            if (Kp, Np) != (K, N):
                weight_t = jnp.pad(weight_t, ((0, Kp - K), (0, Np - N)))
            bias2d = bias.reshape(1, N)
            if Np != N:
                bias2d = jnp.pad(bias2d, ((0, 0), (0, Np - N)))

            cost = pl.CostEstimate(
                flops=2 * Mp * Kp * Np,
                transcendentals=0,
                bytes_accessed=int(Mp * Kp * in_bytes + Kp * Np * in_bytes
                                   + Np * bias_bytes + Mp * Np * out_bytes),
            )
            out = pl.pallas_call(
                functools.partial(_fc_resident_kernel, apply_relu=relu),
                out_shape=jax.ShapeDtypeStruct((Mp, Np), out_dtype),
                grid_spec=pltpu.PrefetchScalarGridSpec(
                    num_scalar_prefetch=0,
                    grid=(Mp // tm,),
                    in_specs=[
                        pl.BlockSpec((tm, Kp), lambda i: (i, 0)),
                        pl.BlockSpec((Kp, Np), lambda i: (0, 0)),  # DMA'd once
                        pl.BlockSpec((1, Np), lambda i: (0, 0)),
                    ],
                    out_specs=pl.BlockSpec((tm, Np), lambda i: (i, 0)),
                ),
                compiler_params=pltpu.CompilerParams(
                    dimension_semantics=("parallel",),
                    vmem_limit_bytes=int(budget),
                ),
                cost_estimate=cost,
            )(x, weight_t, bias2d)
            return out[:M, :N]

    # ---------------- General tiled path ----------------
    # Prefer large tm (divides weight re-stream traffic), then tn, then tk.
    tm = _adaptive_tile(M, m_align, max_tm)
    tn = _adaptive_tile(N, 128, max_tn)
    tk = _adaptive_tile(K, 128, max_tk)
    tm, tn, tk = _fit_tiles_to_budget(tm, tn, tk, in_bytes, out_bytes, budget, m_align)

    Mp, Np, Kp = _round_up(M, tm), _round_up(N, tn), _round_up(K, tk)

    # v7x has 2 TensorCores: make sure at least one parallel axis has >=2
    # blocks when it is cheap to split.
    if Mp // tm == 1 and Np // tn == 1 and tn >= 256:
        tn //= 2
        Np = _round_up(N, tn)

    if (Mp, Kp) != (M, K):
        x = jnp.pad(x, ((0, Mp - M), (0, Kp - K)))
    if (Kp, Np) != (K, N):
        weight_t = jnp.pad(weight_t, ((0, Kp - K), (0, Np - N)))
    bias2d = bias.reshape(1, N)
    if Np != N:
        bias2d = jnp.pad(bias2d, ((0, 0), (0, Np - N)))

    grid = (Mp // tm, Np // tn, Kp // tk)
    grid_m, grid_n, _ = grid

    cost = pl.CostEstimate(
        flops=2 * Mp * Kp * Np,
        transcendentals=0,
        bytes_accessed=int(
            Mp * Kp * in_bytes * grid_n        # x re-streamed per N tile
            + Kp * Np * in_bytes * grid_m      # weight re-streamed per M tile
            + Np * bias_bytes
            + Mp * Np * out_bytes),
    )

    out = pl.pallas_call(
        functools.partial(_fc_tiled_kernel, apply_relu=relu),
        out_shape=jax.ShapeDtypeStruct((Mp, Np), out_dtype),
        grid_spec=pltpu.PrefetchScalarGridSpec(
            num_scalar_prefetch=0,
            grid=grid,
            in_specs=[
                pl.BlockSpec((tm, tk), lambda i, j, k: (i, k)),
                pl.BlockSpec((tk, tn), lambda i, j, k: (k, j)),
                pl.BlockSpec((1, tn), lambda i, j, k: (0, j)),
            ],
            out_specs=pl.BlockSpec((tm, tn), lambda i, j, k: (i, j)),
            scratch_shapes=[pltpu.VMEM((tm, tn), jnp.float32)],
        ),
        compiler_params=pltpu.CompilerParams(
            dimension_semantics=("parallel", "parallel", "arbitrary"),
            vmem_limit_bytes=int(budget),
        ),
        cost_estimate=cost,
    )(x, weight_t, bias2d)

    return out[:M, :N]


def init_fc_params(key, in_features, out_features, dtype=jnp.float32):
    """Deterministic init mimicking nn.Linear (uniform(-1/sqrt(in), 1/sqrt(in)))."""
    k_w, k_b = jax.random.split(key)
    bound = 1.0 / jnp.sqrt(jnp.asarray(in_features, dtype=jnp.float32))
    # PyTorch stores weight as (out, in); we keep the transposed layout (in, out).
    weight_t = jax.random.uniform(
        k_w, (in_features, out_features), dtype=dtype, minval=-bound, maxval=bound)
    bias = jax.random.uniform(
        k_b, (out_features,), dtype=dtype, minval=-bound, maxval=bound)
    return weight_t, bias


if __name__ == "__main__":
    key = jax.random.PRNGKey(0)
    k_x, k_p, k_x2, k_p2, k_x3, k_p3 = jax.random.split(key, 6)

    # --- Test 1: small, unaligned shapes (padding path), ReLU on.
    #     Exercises the weight-resident fast path.
    B, fin, fout = 8, 32, 64
    x = jax.random.normal(k_x, (B, fin), dtype=jnp.float32)
    w, b = init_fc_params(k_p, fin, fout)
    out = jax.block_until_ready(fc_forward(x, w, b, relu=True))
    ref = jnp.maximum(x @ w + b, 0.0)
    assert out.shape == (B, fout)
    assert jnp.allclose(out, ref, atol=1e-5, rtol=1e-5)

    # --- Test 2: weight-resident path with a larger batch, no ReLU.
    B2, fin2, fout2 = 256, 512, 128
    x2 = jax.random.normal(k_x2, (B2, fin2), dtype=jnp.float32)
    w2, b2 = init_fc_params(k_p2, fin2, fout2)
    out2 = jax.block_until_ready(fc_forward(x2, w2, b2, relu=False))
    ref2 = x2 @ w2 + b2
    assert out2.shape == (B2, fout2)
    assert jnp.allclose(out2, ref2, atol=1e-4, rtol=1e-4)

    # --- Test 3: force the general tiled path (multi-step grid on all axes,
    #     bias folded into the K accumulator init), ReLU on.
    B3, fin3, fout3 = 192, 1024, 384
    x3 = jax.random.normal(k_x3, (B3, fin3), dtype=jnp.float32)
    w3, b3 = init_fc_params(k_p3, fin3, fout3)
    out3 = jax.block_until_ready(
        fc_forward(x3, w3, b3, relu=True, allow_weight_resident=False,
                   max_tm=128, max_tn=128, max_tk=256))
    ref3 = jnp.maximum(x3 @ w3 + b3, 0.0)
    assert out3.shape == (B3, fout3)
    assert jnp.allclose(out3, ref3, atol=1e-4, rtol=1e-4)

    # --- Test 4: bf16 input path (f32 accumulate), tiled, looser tolerance.
    out4 = jax.block_until_ready(
        fc_forward(x3, w3, b3, relu=True, use_bf16=True,
                   allow_weight_resident=False,
                   max_tm=256, max_tn=256, max_tk=512))
    assert out4.shape == (B3, fout3)
    assert jnp.allclose(out4, ref3, atol=5e-2, rtol=5e-2)

    print("KERNEL_OK")
</pallas_src>

<mosaic_0001>
module attributes {stable_mosaic.version = 11 : i64} {
  func.func @_fc_resident_kernel(%arg0: i32, %arg1: memref<8x128xf32, #tpu.memory_space<vmem>>, %arg2: memref<128x128xf32, #tpu.memory_space<vmem>>, %arg3: memref<1x128xf32, #tpu.memory_space<vmem>>, %arg4: memref<8x128xf32, #tpu.memory_space<vmem>>) attributes {dimension_semantics = [#tpu.dimension_semantics<parallel>], iteration_bounds = array<i64: 1>, scalar_prefetch = 0 : i64, scratch_operands = 0 : i64, tpu.core_type = #tpu.core_type<tc>, window_params = [{transform_indices = @transform_0, window_bounds = array<i64: 8, 128>}, {pipeline_mode = #tpu.pipeline_mode<synchronous>, transform_indices = @transform_1, window_bounds = array<i64: 128, 128>}, {pipeline_mode = #tpu.pipeline_mode<synchronous>, transform_indices = @transform_2, window_bounds = array<i64: 1, 128>}, {transform_indices = @transform_3, window_bounds = array<i64: 8, 128>}]} {
    %c0 = arith.constant 0 : index
    %c0_0 = arith.constant 0 : index
    %0 = vector.load %arg1[%c0, %c0_0] : memref<8x128xf32, #tpu.memory_space<vmem>>, vector<8x128xf32>
    %c0_1 = arith.constant 0 : index
    %c0_2 = arith.constant 0 : index
    %1 = vector.load %arg2[%c0_1, %c0_2] : memref<128x128xf32, #tpu.memory_space<vmem>>, vector<128x128xf32>
    %cst = arith.constant dense<0.000000e+00> : vector<8x128xf32>
    %2 = tpu.matmul %0, %1, %cst {dimension_numbers = #tpu.dot_dimension_numbers<[1], [0], [0], [1], [0, 0, 1, 1], [], []>} : vector<8x128xf32>, vector<128x128xf32>, vector<8x128xf32> -> vector<8x128xf32>
    %c0_3 = arith.constant 0 : index
    %c0_4 = arith.constant 0 : index
    %3 = vector.load %arg3[%c0_3, %c0_4] : memref<1x128xf32, #tpu.memory_space<vmem>>, vector<1x128xf32>
    %4 = vector.broadcast %3 : vector<1x128xf32> to vector<8x128xf32>
    %5 = arith.addf %2, %4 : vector<8x128xf32>
    %cst_5 = arith.constant 0.000000e+00 : f32
    %6 = vector.broadcast %cst_5 : f32 to vector<8x128xf32>
    %7 = arith.maximumf %5, %6 : vector<8x128xf32>
    %c0_6 = arith.constant 0 : index
    %c0_7 = arith.constant 0 : index
    %8 = vector.load %arg4[%c0_6, %c0_7] : memref<8x128xf32, #tpu.memory_space<vmem>>, vector<8x128xf32>
    tpu.vector_store %arg4[%c0_6, %c0_7], %7 {strides = array<i32>} : memref<8x128xf32, #tpu.memory_space<vmem>>, vector<8x128xf32>,
    return
  }
  func.func @transform_0(%arg0: i32) -> (i32, i32) {
    %c0_i32 = arith.constant 0 : i32
    %c0_i32_0 = arith.constant 0 : i32
    return %arg0, %c0_i32 : i32, i32
  }
  func.func @transform_1(%arg0: i32) -> (i32, i32) {
    %c0_i32 = arith.constant 0 : i32
    %c0_i32_0 = arith.constant 0 : i32
    %c0_i32_1 = arith.constant 0 : i32
    return %c0_i32, %c0_i32_0 : i32, i32
  }
  func.func @transform_2(%arg0: i32) -> (i32, i32) {
    %c0_i32 = arith.constant 0 : i32
    %c0_i32_0 = arith.constant 0 : i32
    %c0_i32_1 = arith.constant 0 : i32
    return %c0_i32, %c0_i32_0 : i32, i32
  }
  func.func @transform_3(%arg0: i32) -> (i32, i32) {
    %c0_i32 = arith.constant 0 : i32
    %c0_i32_0 = arith.constant 0 : i32
    return %arg0, %c0_i32 : i32, i32
  }
}

</mosaic_0001>

<llo_original>
// kernel: tpu_custom_call.1
$region0: #{tpu_custom_call.1}
  #allocation0 [shape = 'u32[]', space=smem, size = 0x4, offset = 0x4, fixed_abs, tag = 'smem constant byte address 0x4 - core index']
  #allocation1 [shape = 'u32[144,128]{1,0:T(1,128)}', space=vmem, size = 0x12000, scoped, tag = 'internal scratch']
  %s0 = inlined_call_operand.hbm [shape: f32[8,128], index: 0, kind: input, shape index: {}]
  %s1 = inlined_call_operand.hbm [shape: f32[128,128], index: 1, kind: input, shape index: {}]
  %s2 = inlined_call_operand.vmem [shape: f32[1,128], index: 2, kind: input, shape index: {}]
  %s3 = inlined_call_operand.hbm [shape: f32[8,128], index: 3, kind: output, shape index: {}]
  %s4 = sld [smem:[#allocation0]]
  $region30: #{tpu_custom_call.1} parent=0
    _
  %s6 = ssub.s32 1, %s4
  %s7 = scalar_select 0, %s6, %s4
  $region1: #{tpu_custom_call.1} parent=0
    #allocation2 [shape = 'u8[4096]{0}', space=vmem, size = 0x1000, scoped, tag = 'input window, operand 0, single buffered']
    #allocation3 [shape = 's32[1]{0}', space=sflag, size = 0x4, scoped, tag = 'scoped memory for tpu_custom_call.1']
    #allocation4 [shape = 's32[1]{0}', space=sflag, size = 0x4, scoped, tag = 'scoped memory for tpu_custom_call.1']
    #allocation5 [shape = 'u8[65536]{0}', space=vmem, size = 0x10000, scoped, tag = 'input window, operand 1, single buffered']
    #allocation6 [shape = 's32[1]{0}', space=sflag, size = 0x4, scoped, tag = 'scoped memory for tpu_custom_call.1']
    #allocation7 [shape = 'u8[4096]{0}', space=vmem, size = 0x1000, scoped, tag = 'output window, operand 0, single buffered']
    %8 = vsyncpa [#allocation3], 0
    %9 = vsyncpa [#allocation6], 0
    %10 = vsyncpa [#allocation4], 0
    // Predicated region
    $region2: #{tpu_custom_call.1} parent=1 // pred_check
      _
    $region3: #{tpu_custom_call.1} parent=1 // pred_check_branch
      %12 = sbr.rel (0) target = $region5
    $region4: #{tpu_custom_call.1} parent=1 // pred_region
      %s14 = ssub.s32 128, 128
      %15 = vsyncadd [#allocation3], %s14
      %s17 = sshll.u32 [#allocation2], 4
      %s18 = int_to_ptr.vmem [resolvable:$true] %s17
      %20 = dma.hbm_to_vmem [thread:$0]  %s0, 128, %s18, [#allocation3]
    $region5: #{tpu_custom_call.1} parent=1 // pred_fallthru
      _
    // Predicated region
    $region6: #{tpu_custom_call.1} parent=1 // pred_check
      _
    $region7: #{tpu_custom_call.1} parent=1 // pred_check_branch
      %22 = sbr.rel (0) target = $region9
    $region8: #{tpu_custom_call.1} parent=1 // pred_region
      %s24 = ssub.s32 2048, 2048
      %25 = vsyncadd [#allocation6], %s24
      %s26 = sshll.u32 [#allocation5], 4
      %s27 = int_to_ptr.vmem [resolvable:$true] %s26
      %32 = dma.hbm_to_vmem [thread:$0]  %s1, 2048, %s27, [#allocation6], 128, 128, 8
    $region9: #{tpu_custom_call.1} parent=1 // pred_fallthru
      _
    // Predicated region
    $region10: #{tpu_custom_call.1} parent=1 // pred_check
      _
    $region11: #{tpu_custom_call.1} parent=1 // pred_check_branch
      %34 = sbr.rel (0) target = $region13
    $region12: #{tpu_custom_call.1} parent=1 // pred_region
      _
    $region13: #{tpu_custom_call.1} parent=1 // pred_fallthru
      _
    // Predicated region
    $region14: #{tpu_custom_call.1} parent=1 // pred_check
      _
    $region15: #{tpu_custom_call.1} parent=1 // pred_check_branch
      %36 = sbr.rel (0) target = $region17
    $region16: #{tpu_custom_call.1} parent=1 // pred_region
      %37 = dma.done [#allocation3], 128
    $region17: #{tpu_custom_call.1} parent=1 // pred_fallthru
      _
    // Predicated region
    $region18: #{tpu_custom_call.1} parent=1 // pred_check
      _
    $region19: #{tpu_custom_call.1} parent=1 // pred_check_branch
      %39 = sbr.rel (0) target = $region21
    $region20: #{tpu_custom_call.1} parent=1 // pred_region
      %40 = dma.done [#allocation6], 2048
    $region21: #{tpu_custom_call.1} parent=1 // pred_fallthru
      _
    %v41 = vld [vmem:[#allocation2] sm:$0xff]
    %v42 = vld [vmem:[#allocation5] sm:$0xff]
    %v43 = vld [vmem:[#allocation5 + $0x8] sm:$0xff]
    %v44 = vld [vmem:[#allocation5 + $0x10] sm:$0xff]
    %v45 = vld [vmem:[#allocation5 + $0x18] sm:$0xff]
    %v46 = vld [vmem:[#allocation5 + $0x20] sm:$0xff]
    %v47 = vld [vmem:[#allocation5 + $0x28] sm:$0xff]
    %v48 = vld [vmem:[#allocation5 + $0x30] sm:$0xff]
    %v49 = vld [vmem:[#allocation5 + $0x38] sm:$0xff]
    %v50 = vld [vmem:[#allocation5 + $0x40] sm:$0xff]
    %v51 = vld [vmem:[#allocation5 + $0x48] sm:$0xff]
    %v52 = vld [vmem:[#allocation5 + $0x50] sm:$0xff]
    %v53 = vld [vmem:[#allocation5 + $0x58] sm:$0xff]
    %v54 = vld [vmem:[#allocation5 + $0x60] sm:$0xff]
    %v55 = vld [vmem:[#allocation5 + $0x68] sm:$0xff]
    %v56 = vld [vmem:[#allocation5 + $0x70] sm:$0xff]
    %v57 = vld [vmem:[#allocation5 + $0x78] sm:$0xff]
    %v58 = vld [vmem:[%s2] sm:$0x1]
    %v60 = vlaneseq
    %v61 = vshrl.u32 %v60, 7
    %v62 = vsub.s32 0, %v61
    %v63 = vrot.slane %v58, %v62
    %65 = vmatprep.subr.mxu0 0.0
    %66 = vmatpush1.msra.mxu0 %v42
    %67 = vmatprep.subr.mxu0 0.0
    %68 = vmatpush1.msra.mxu0 %v43
    %69 = vmatprep.subr.mxu0 0.0
    %70 = vmatpush1.msra.mxu0 %v44
    %71 = vmatprep.subr.mxu0 0.0
    %72 = vmatpush1.msra.mxu0 %v45
    %73 = vmatprep.subr.mxu0 0.0
    %74 = vmatpush1.msra.mxu0 %v46
    %75 = vmatprep.subr.mxu0 0.0
    %76 = vmatpush1.msra.mxu0 %v47
    %77 = vmatprep.subr.mxu0 0.0
    %78 = vmatpush1.msra.mxu0 %v48
    %79 = vmatprep.subr.mxu0 0.0
    %80 = vmatpush1.msra.mxu0 %v49
    %81 = vmatprep.subr.mxu0 0.0
    %82 = vmatpush1.msra.mxu0 %v50
    %83 = vmatprep.subr.mxu0 0.0
    %84 = vmatpush1.msra.mxu0 %v51
    %85 = vmatprep.subr.mxu0 0.0
    %86 = vmatpush1.msra.mxu0 %v52
    %87 = vmatprep.subr.mxu0 0.0
    %88 = vmatpush1.msra.mxu0 %v53
    %89 = vmatprep.subr.mxu0 0.0
    %90 = vmatpush1.msra.mxu0 %v54
    %91 = vmatprep.subr.mxu0 0.0
    %92 = vmatpush1.msra.mxu0 %v55
    %93 = vmatprep.subr.mxu0 0.0
    %94 = vmatpush1.msra.mxu0 %v56
    %95 = vmatprep.subr.mxu0 0.0
    %96 = vmatpush1.msra.mxu0 %v57
    %97 = vmatprep.subr.mxu0 0.0
    %98 = vmatpush1.msra.mxu0 0.0
    %99 = vmatprep.subr.mxu0 0.0
    %100 = vmatpush1.msra.mxu0 0.0
    %101 = vmatprep.subr.mxu0 0.0
    %102 = vmatpush1.msra.mxu0 0.0
    %103 = vmatprep.subr.mxu0 0.0
    %104 = vmatpush1.msra.mxu0 0.0
    %105 = vmatprep.subr.mxu0 0.0
    %106 = vmatpush1.msra.mxu0 0.0
    %107 = vmatprep.subr.mxu0 0.0
    %108 = vmatpush1.msra.mxu0 0.0
    %109 = vmatprep.subr.mxu0 0.0
    %110 = vmatpush1.msra.mxu0 0.0
    %111 = vmatprep.subr.mxu0 0.0
    %112 = vmatpush1.msra.mxu0 0.0
    %113 = vmatprep.subr.mxu0 0.0
    %114 = vmatpush1.msra.mxu0 0.0
    %115 = vmatprep.subr.mxu0 0.0
    %116 = vmatpush1.msra.mxu0 0.0
    %117 = vmatprep.subr.mxu0 0.0
    %118 = vmatpush1.msra.mxu0 0.0
    %119 = vmatprep.subr.mxu0 0.0
    %120 = vmatpush1.msra.mxu0 0.0
    %121 = vmatprep.subr.mxu0 0.0
    %122 = vmatpush1.msra.mxu0 0.0
    %123 = vmatprep.subr.mxu0 0.0
    %124 = vmatpush1.msra.mxu0 0.0
    %125 = vmatprep.subr.mxu0 0.0
    %126 = vmatpush1.msra.mxu0 0.0
    %127 = vmatprep.subr.mxu0 0.0
    %128 = vmatpush1.msra.mxu0 0.0
    %129 = vmatprep.mubr.f32.mxu0 0.0
    %130 = vmatmul.mubr.f32.gmra.mrb[0].mxu0 %v41
    %v131 = vpop.f32.mrb[0].mxu0
    %v132 = vadd.f32 %v63, %v131
    %v133 = vpop.f32.mrb[0].mxu0
    %134 = vdwg.mxu0
    %v135 = vmax.f32 %v132, 0.0
    %136 = vst [vmem:[#allocation7] sm:$0xff] %v135
    // Predicated region
    $region22: #{tpu_custom_call.1} parent=1 // pred_check
      _
    $region23: #{tpu_custom_call.1} parent=1 // pred_check_branch
      %138 = sbr.rel (0) target = $region25
    $region24: #{tpu_custom_call.1} parent=1 // pred_region
      %s140 = ssub.s32 128, 128
      %141 = vsyncadd [#allocation4], %s140
      %s143 = sshll.u32 [#allocation7], 4
      %s144 = int_to_ptr.vmem [resolvable:$true] %s143
      %146 = dma.vmem_to_hbm [thread:$0]  %s144, 128, %s3, [#allocation4]
    $region25: #{tpu_custom_call.1} parent=1 // pred_fallthru
      _
    // Predicated region
    $region26: #{tpu_custom_call.1} parent=1 // pred_check
      _
    $region27: #{tpu_custom_call.1} parent=1 // pred_check_branch
      %148 = sbr.rel (0) target = $region29
    $region28: #{tpu_custom_call.1} parent=1 // pred_region
      %149 = dma.done [#allocation4], 128
    $region29: #{tpu_custom_call.1} parent=1 // pred_fallthru
      _
    %150 = vsyncpa [#allocation3], 1
    %151 = vsyncpa [#allocation6], 1
    %152 = vsyncpa [#allocation4], 1

</llo_original>
